<compile_context>
chip_gen: v5e
topology: v5e:2x2
jax: 0.10.0
libtpu: 0.0.40
codegen_flags: <defaults>
</compile_context>

<pallas_src>
import functools

import jax
import jax.numpy as jnp
from jax.experimental import pallas as pl
from jax.experimental.pallas import tpu as pltpu

_LANE = 128


def _softmax_kernel(x_ref, o_ref, *, approx_recip):
    # Rows are independent: a ragged/padded last row-block may read undefined
    # data (possible inf/NaN through exp), but it cannot contaminate valid
    # rows and the out-of-range output rows are discarded on writeback.
    # NOTE: do not add any cross-row reduction here for that reason.
    x_nat = x_ref[...]
    # Row max on the native-dtype tile (packed vregs for bf16/f16) before the
    # f32 upcast: halves XLU reduce traffic and drops one full f32 temporary.
    m = jnp.max(x_nat, axis=-1, keepdims=True).astype(jnp.float32)   # XLU
    e = jnp.exp(x_nat.astype(jnp.float32) - m)                       # EUP
    s = jnp.sum(e, axis=-1, keepdims=True)                           # XLU
    # Reciprocal only on the (rows, 1) sum column (exact by default: ~1/C of
    # the exp's EUP work, and the kernel is HBM-bound anyway), then a cheap
    # VPU broadcast-multiply over the whole tile.
    inv = pl.reciprocal(s, approx=approx_recip)
    o_ref[...] = (e * inv).astype(o_ref.dtype)


def _sublane(dtype) -> int:
    # Sub-32-bit dtypes pack along sublanes: full vreg tiles need more rows.
    return {4: 8, 2: 16, 1: 32}.get(jnp.dtype(dtype).itemsize, 8)


def _vmem_config():
    """Per-generation (block_budget_bytes, vmem_limit_bytes, num_tensorcores)."""
    try:
        vmem_cap = int(pltpu.get_tpu_info().vmem_capacity_bytes)
    except Exception:
        vmem_cap = 64 << 20                      # conservative (v7x-sized) fallback
    if vmem_cap >= (96 << 20):
        # v5e / v6e: 128 MiB physical VMEM, 1 TensorCore per chip.
        return 8 << 20, 96 << 20, 1
    # v7x: 64 MiB physical VMEM, 2 TensorCores per chip; leave compiler
    # scratch headroom under the physical capacity.
    return 6 << 20, 56 << 20, 2


def _pick_row_tile(n, c, dtype, budget_bytes, num_tc) -> int:
    """Largest sublane-aligned row tile whose f32 working block fits the budget."""
    sub = _sublane(dtype)
    rows = max(sub, budget_bytes // max(1, c * 4))        # size the f32 working copy
    if num_tc > 1:
        # Only split small inputs across grid steps on multi-TC parts (v7x);
        # on 1-TC chips the grid is a serial loop and extra steps are overhead.
        rows = min(rows, max(sub, pl.cdiv(n, num_tc)))
    rows = max(sub, (rows // sub) * sub)                   # full sublane-packed tiles
    rows = min(rows, pl.cdiv(n, sub) * sub)                # don't exceed (padded) n
    return int(rows)


def _softmax_lastdim_2d(x, *, row_tile=None, approx_recip=False):
    """Numerically-stable softmax along the last axis of a 2-D (N, C) array."""
    n, c = x.shape
    budget, vmem_limit, num_tc = _vmem_config()

    # Lane-dense output: when C is not a multiple of 128, pad with -inf in the
    # wrapper (exp(-inf) = 0, so row sums are unaffected) and slice afterwards.
    c_pad = pl.cdiv(c, _LANE) * _LANE
    x_run = x
    if c_pad != c:
        x_run = jnp.pad(x, ((0, 0), (0, c_pad - c)), constant_values=-jnp.inf)

    if row_tile is None:
        row_tile = _pick_row_tile(n, c_pad, x.dtype, budget, num_tc)
    # TODO(synk): for extremely wide C where even a minimum-row block busts
    # VMEM (roughly C * 4B * ~7 buffers > limit), fall back to a C-tiled
    # two-pass / online-softmax grid instead of a single full-C block.

    grid = (pl.cdiv(n, row_tile),)
    itemsize = jnp.dtype(x.dtype).itemsize
    cost = pl.CostEstimate(
        flops=5 * n * c_pad,
        transcendentals=n * c_pad,
        bytes_accessed=2 * n * c_pad * itemsize,
    )
    kernel = functools.partial(_softmax_kernel, approx_recip=approx_recip)
    out = pl.pallas_call(
        kernel,
        out_shape=jax.ShapeDtypeStruct((n, c_pad), x.dtype),
        grid=grid,
        in_specs=[pl.BlockSpec((row_tile, c_pad), lambda i: (i, 0))],
        out_specs=pl.BlockSpec((row_tile, c_pad), lambda i: (i, 0)),
        compiler_params=pltpu.CompilerParams(
            dimension_semantics=("parallel",),
            vmem_limit_bytes=vmem_limit,
        ),
        cost_estimate=cost,
    )(x_run)
    if c_pad != c:
        out = out[:, :c]
    return out


def softmax_module_forward(x, *, row_tile=None, approx_recip=False):
    """aten._softmax(x, dim=1, half_to_float=False) for any rank >= 2 input."""
    if x.ndim == 2:
        return _softmax_lastdim_2d(x, row_tile=row_tile, approx_recip=approx_recip)
    # Move the softmax axis (dim=1) onto the lane axis, flatten the rest into
    # rows, run the 2-D kernel, then restore the original layout (wrapper-side
    # layout plumbing only; the reduction stays inside the kernel).
    xt = jnp.moveaxis(x, 1, -1)
    flat = xt.reshape(-1, xt.shape[-1])
    y = _softmax_lastdim_2d(flat, row_tile=row_tile, approx_recip=approx_recip)
    return jnp.moveaxis(y.reshape(xt.shape), -1, 1)


if __name__ == "__main__":
    key = jax.random.PRNGKey(0)
    k1, k2, k3, k4 = jax.random.split(key, 4)

    # Case 1: 4-D NCHW-style input, softmax over dim=1 (channels).
    x1 = jax.random.normal(k1, (2, 4, 16, 16), dtype=jnp.float32)
    out1 = jax.block_until_ready(softmax_module_forward(x1))
    ref1 = jax.nn.softmax(x1, axis=1)
    assert out1.shape == x1.shape and out1.dtype == x1.dtype
    assert jnp.allclose(out1, ref1, atol=1e-6, rtol=1e-6)
    assert jnp.allclose(jnp.sum(out1, axis=1), 1.0, atol=1e-5)

    # Case 2: 2-D, lane-aligned C (exact-reciprocal default, PyTorch parity).
    x2 = jax.random.normal(k2, (8, 128), dtype=jnp.float32)
    out2 = jax.block_until_ready(softmax_module_forward(x2))
    ref2 = jax.nn.softmax(x2, axis=1)
    assert out2.shape == x2.shape and out2.dtype == x2.dtype
    assert jnp.allclose(out2, ref2, atol=1e-6, rtol=1e-6)

    # Case 3: ragged N and C not a multiple of 128 (-inf lane padding path).
    x3 = jax.random.normal(k3, (20, 160), dtype=jnp.float32)
    out3 = jax.block_until_ready(softmax_module_forward(x3, row_tile=8))
    ref3 = jax.nn.softmax(x3, axis=1)
    assert out3.shape == x3.shape and out3.dtype == x3.dtype
    assert jnp.allclose(out3, ref3, atol=1e-6, rtol=1e-6)

    # Case 4: bf16 input (half_to_float=False -> bf16 output), native-dtype max.
    x4 = jax.random.normal(k4, (16, 256), dtype=jnp.bfloat16)
    out4 = jax.block_until_ready(softmax_module_forward(x4))
    ref4 = jax.nn.softmax(x4.astype(jnp.float32), axis=1).astype(jnp.bfloat16)
    assert out4.dtype == jnp.bfloat16
    assert jnp.allclose(out4.astype(jnp.float32), ref4.astype(jnp.float32),
                        atol=2e-2, rtol=2e-2)
    assert jnp.all(jnp.argmax(out4, axis=1) == jnp.argmax(ref4, axis=1))

    print("KERNEL_OK")
</pallas_src>

<mosaic_0001>
module attributes {stable_mosaic.version = 11 : i64} {
  func.func @_softmax_kernel(%arg0: i32, %arg1: memref<256x128xf32, #tpu.memory_space<vmem>>, %arg2: memref<256x128xf32, #tpu.memory_space<vmem>>) attributes {dimension_semantics = [#tpu.dimension_semantics<parallel>], iteration_bounds = array<i64: 2>, scalar_prefetch = 0 : i64, scratch_operands = 0 : i64, tpu.core_type = #tpu.core_type<tc>, window_params = [{transform_indices = @transform_0, window_bounds = array<i64: 256, 128>}, {transform_indices = @transform_1, window_bounds = array<i64: 256, 128>}]} {
    %c0 = arith.constant 0 : index
    %c0_0 = arith.constant 0 : index
    %0 = vector.load %arg1[%c0, %c0_0] : memref<256x128xf32, #tpu.memory_space<vmem>>, vector<256x128xf32>
    %cst = arith.constant dense<0xFF800000> : vector<256xf32>
    %1 = vector.multi_reduction <maximumf>, %0, %cst [1] : vector<256x128xf32> to vector<256xf32>
    %2 = vector.shape_cast %1 : vector<256xf32> to vector<256x1xf32>
    %3 = vector.broadcast %2 : vector<256x1xf32> to vector<256x128xf32>
    %4 = arith.subf %0, %3 : vector<256x128xf32>
    %5 = math.exp %4 : vector<256x128xf32>
    %cst_1 = arith.constant dense<0.000000e+00> : vector<256xf32>
    %6 = vector.multi_reduction <add>, %5, %cst_1 [1] : vector<256x128xf32> to vector<256xf32>
    %7 = vector.shape_cast %6 : vector<256xf32> to vector<256x1xf32>
    %8 = tpu.reciprocal %7 : vector<256x1xf32> -> vector<256x1xf32>
    %9 = vector.broadcast %8 : vector<256x1xf32> to vector<256x128xf32>
    %10 = arith.mulf %5, %9 : vector<256x128xf32>
    %c0_2 = arith.constant 0 : index
    %c0_3 = arith.constant 0 : index
    %11 = vector.load %arg2[%c0_2, %c0_3] : memref<256x128xf32, #tpu.memory_space<vmem>>, vector<256x128xf32>
    tpu.vector_store %arg2[%c0_2, %c0_3], %10 {strides = array<i32>} : memref<256x128xf32, #tpu.memory_space<vmem>>, vector<256x128xf32>,
    return
  }
  func.func @transform_0(%arg0: i32) -> (i32, i32) {
    %c0_i32 = arith.constant 0 : i32
    %c0_i32_0 = arith.constant 0 : i32
    return %arg0, %c0_i32 : i32, i32
  }
  func.func @transform_1(%arg0: i32) -> (i32, i32) {
    %c0_i32 = arith.constant 0 : i32
    %c0_i32_0 = arith.constant 0 : i32
    return %arg0, %c0_i32 : i32, i32
  }
}

</mosaic_0001>

<llo_original>
// kernel: tpu_custom_call.1
$region0: #{tpu_custom_call.1}
  #allocation0 [shape = 'u32[]', space=smem, size = 0x4, offset = 0x4, fixed_abs, tag = 'smem constant byte address 0x4 - core index']
  #allocation1 [shape = 'u32[72,128]{1,0:T(1,128)}', space=vmem, size = 0x9000, scoped, tag = 'internal scratch']
  %s0 = inlined_call_operand.hbm [shape: f32[512,128], index: 0, kind: input, shape index: {}]
  %s1 = inlined_call_operand.hbm [shape: f32[512,128], index: 1, kind: output, shape index: {}]
  %s2 = sld [smem:[#allocation0]]
  $region41: #{tpu_custom_call.1} parent=0
    _
  %s4 = ssub.s32 1, %s2
  %s5 = scalar_select 0, %s4, %s2
  $region1: #{tpu_custom_call.1} parent=0
    #allocation2 [shape = 'u8[262144]{0}', space=vmem, size = 0x40000, scoped, tag = 'input window, operand 0']
    #allocation3 [shape = 's32[2]{0}', space=sflag, size = 0x8, scoped, tag = 'scoped memory for tpu_custom_call.1']
    #allocation4 [shape = 's32[2]{0}', space=sflag, size = 0x8, scoped, tag = 'scoped memory for tpu_custom_call.1']
    #allocation5 [shape = 'u8[262144]{0}', space=vmem, size = 0x40000, scoped, tag = 'output window, operand 0']
    %6 = vsyncpa [#allocation3], 0
    %s7 = scalar_lea.sflag [#allocation3], 1
    %8 = vsyncpa %s7, 0
    %9 = vsyncpa [#allocation4], 0
    %s10 = scalar_lea.sflag [#allocation4], 1
    %11 = vsyncpa %s10, 0
    loop: start=0, step=1, limit=4
    $region2: #{tpu_custom_call.1} parent=1 // loop_pre_header
      _
    $region3: #{tpu_custom_call.1} parent=1 // loop_header
      %s13 = sphi 0, %s17
      %p14 = scmp.ge.s32.totalorder %s13, 4
      %s23 = sphi 0, %s25
      %s26 = sphi 0, %s23
      %s27 = sphi 0, %s26
      %s43 = sphi 0, %s27
      %s49 = sphi 0, %s51
      %s52 = sphi 0, %s49
      %s53 = sphi 0, %s52
      %s69 = sphi 0, %s53
    $region4: #{tpu_custom_call.1} parent=1 // loop_header_branch
      %16 = sbr.rel (%p14) target = $region8
    $region5: #{tpu_custom_call.1} parent=1 // loop_body
      %s18 = ssub.s32 %s13, 1
      %s19 = ssub.s32 %s13, 2
      %s20 = sadd.s32 %s13, 1
      %s21 = ssub.s32 %s13, %s20
      %p22 = scmp.eq.s32.totalorder %s21, 0
      %s24 = sadd.s32 %s23, 1
      %s25 = scalar_select %p22, %s23, %s24
      %p28 = pneg %p22
      %p29 = scmp.eq.s32.totalorder %s13, 1
      %p30 = por %p28, %p29
      %p31 = scmp.ne.s32.totalorder %s23, %s26
      %p32 = scmp.eq.s32.totalorder %s13, 0
      %p33 = por %p31, %p32
      %p34 = scmp.ne.s32.totalorder %s23, %s26
      %p35 = scmp.eq.s32.totalorder %s18, 1
      %p36 = por %p34, %p35
      %p37 = scmp.ne.s32.totalorder %s26, %s27
      %p38 = scmp.eq.s32.totalorder %s18, 0
      %p39 = por %p37, %p38
      %p40 = scmp.ne.s32.totalorder %s26, %s27
      %p41 = scmp.eq.s32.totalorder %s19, 1
      %p42 = por %p40, %p41
      %p44 = scmp.ne.s32.totalorder %s27, %s43
      %p45 = scmp.eq.s32.totalorder %s19, 0
      %p46 = por %p44, %p45
      %s47 = ssub.s32 %s13, %s20
      %p48 = scmp.eq.s32.totalorder %s47, 0
      %s50 = sadd.s32 %s49, 1
      %s51 = scalar_select %p48, %s49, %s50
      %p54 = pneg %p48
      %p55 = scmp.eq.s32.totalorder %s13, 1
      %p56 = por %p54, %p55
      %p57 = scmp.ne.s32.totalorder %s49, %s52
      %p58 = scmp.eq.s32.totalorder %s13, 0
      %p59 = por %p57, %p58
      %p60 = scmp.ne.s32.totalorder %s49, %s52
      %p61 = scmp.eq.s32.totalorder %s18, 1
      %p62 = por %p60, %p61
      %p63 = scmp.ne.s32.totalorder %s52, %s53
      %p64 = scmp.eq.s32.totalorder %s18, 0
      %p65 = por %p63, %p64
      %p66 = scmp.ne.s32.totalorder %s52, %s53
      %p67 = scmp.eq.s32.totalorder %s19, 1
      %p68 = por %p66, %p67
      %p70 = scmp.ne.s32.totalorder %s53, %s69
      %p71 = scmp.eq.s32.totalorder %s19, 0
      %p72 = por %p70, %p71
      %p73 = scmp.le.s32.totalorder 1, %s13
      %p74 = scmp.lt.s32.totalorder %s13, 3
      %p75 = pnand %p73, %p74
      %p76 = pneg %p75
      // Predicated region
      $region9: #{tpu_custom_call.1} parent=5 // pred_check
        _
      $region10: #{tpu_custom_call.1} parent=5 // pred_check_branch
        %78 = sbr.rel (%p75) target = $region12
      $region11: #{tpu_custom_call.1} parent=5 // pred_region
        %s79 = ssub.s32 %s13, 1
      $region12: #{tpu_custom_call.1} parent=5 // pred_fallthru
        _
      %p80 = scmp.lt.s32.totalorder %s13, 2
      // Predicated region
      $region13: #{tpu_custom_call.1} parent=5 // pred_check
        %p81 = pneg %p80
      $region14: #{tpu_custom_call.1} parent=5 // pred_check_branch
        %83 = sbr.rel (%p81) target = $region16
      $region15: #{tpu_custom_call.1} parent=5 // pred_region
        // Predicated region
        $region17: #{tpu_custom_call.1} parent=15 // pred_check
          %p84 = pneg %p33
        $region18: #{tpu_custom_call.1} parent=15 // pred_check_branch
          %86 = sbr.rel (%p84) target = $region20
        $region19: #{tpu_custom_call.1} parent=15 // pred_region
          %s87 = sand.u32 %s23, 1
          %s88 = scalar_lea.sflag [#allocation3], %s87
          %s89 = sand.u32 %s23, 1
          %s90 = smul.addr %s89, 256
          %s91 = scalar_lea.vmem [#allocation2], %s90
          %s92 = smul.u32 32, %s13
          %94 = vsyncadd %s88, 0
          %s95 = smul.addr %s92, 8
          %s96 = scalar_lea.hbm %s0, %s95
          %s97 = sshll.u32 %s96, 4
          %s98 = int_to_ptr.hbm [resolvable:$true] %s97
          %s99 = sshll.u32 %s91, 4
          %s100 = int_to_ptr.vmem [resolvable:$true] %s99
          %105 = dma.hbm_to_vmem [thread:$0]  %s98, 4096, %s100, %s88, 128, 128, 8
        $region20: #{tpu_custom_call.1} parent=15 // pred_fallthru
          _
      $region16: #{tpu_custom_call.1} parent=5 // pred_fallthru
        _
      %p106 = scmp.le.s32.totalorder 1, %s13
      %p107 = scmp.lt.s32.totalorder %s13, 3
      %p108 = pnand %p106, %p107
      %p109 = pneg %p108
      // Predicated region
      $region21: #{tpu_custom_call.1} parent=5 // pred_check
        _
      $region22: #{tpu_custom_call.1} parent=5 // pred_check_branch
        %111 = sbr.rel (%p108) target = $region24
      $region23: #{tpu_custom_call.1} parent=5 // pred_region
        %s112 = ssub.s32 %s13, 1
        %s113 = sand.u32 %s26, 1
        %s114 = scalar_lea.sflag [#allocation3], %s113
        %s115 = sand.u32 %s26, 1
        %s116 = smul.addr %s115, 256
        %s117 = scalar_lea.vmem [#allocation2], %s116
        // Predicated region
        $region25: #{tpu_custom_call.1} parent=23 // pred_check
          %p118 = pneg %p39
        $region26: #{tpu_custom_call.1} parent=23 // pred_check_branch
          %120 = sbr.rel (%p118) target = $region28
        $region27: #{tpu_custom_call.1} parent=23 // pred_region
          %122 = dma.done %s114, 4096
        $region28: #{tpu_custom_call.1} parent=23 // pred_fallthru
          _
        %s123 = sand.u32 %s26, 1
        %s124 = scalar_lea.sflag [#allocation3], %s123
        %s125 = sand.u32 %s26, 1
        %s126 = smul.addr %s125, 256
        %s127 = scalar_lea.vmem [#allocation2], %s126
        %p128 = pneg %p39
        %p129 = pneg %p36
        %p130 = pneg %p65
        %p131 = pneg %p62
        %s132 = sand.u32 %s52, 1
        %s133 = scalar_lea.sflag [#allocation4], %s132
        %s134 = sand.u32 %s52, 1
        %s135 = smul.addr %s134, 256
        %s136 = scalar_lea.vmem [#allocation5], %s135
        %s137 = smul.u32 32, %s18
        %s138 = smul.u32 32, %s18
        %v139 = vld [vmem:[%s117] sm:$0xff]
        %v140 = vld [vmem:[%s117 + $0x8] sm:$0xff]
        %v141 = vld [vmem:[%s117 + $0x10] sm:$0xff]
        %v142 = vld [vmem:[%s117 + $0x18] sm:$0xff]
        %v143 = vld [vmem:[%s117 + $0x20] sm:$0xff]
        %v144 = vld [vmem:[%s117 + $0x28] sm:$0xff]
        %v145 = vld [vmem:[%s117 + $0x30] sm:$0xff]
        %v146 = vld [vmem:[%s117 + $0x38] sm:$0xff]
        %v147 = vld [vmem:[%s117 + $0x40] sm:$0xff]
        %v148 = vld [vmem:[%s117 + $0x48] sm:$0xff]
        %v149 = vld [vmem:[%s117 + $0x50] sm:$0xff]
        %v150 = vld [vmem:[%s117 + $0x58] sm:$0xff]
        %v151 = vld [vmem:[%s117 + $0x60] sm:$0xff]
        %v152 = vld [vmem:[%s117 + $0x68] sm:$0xff]
        %v153 = vld [vmem:[%s117 + $0x70] sm:$0xff]
        %v154 = vld [vmem:[%s117 + $0x78] sm:$0xff]
        %v155 = vld [vmem:[%s117 + $0x80] sm:$0xff]
        %v156 = vld [vmem:[%s117 + $0x88] sm:$0xff]
        %v157 = vld [vmem:[%s117 + $0x90] sm:$0xff]
        %v158 = vld [vmem:[%s117 + $0x98] sm:$0xff]
        %v159 = vld [vmem:[%s117 + $0xa0] sm:$0xff]
        %v160 = vld [vmem:[%s117 + $0xa8] sm:$0xff]
        %v161 = vld [vmem:[%s117 + $0xb0] sm:$0xff]
        %v162 = vld [vmem:[%s117 + $0xb8] sm:$0xff]
        %v163 = vld [vmem:[%s117 + $0xc0] sm:$0xff]
        %v164 = vld [vmem:[%s117 + $0xc8] sm:$0xff]
        %v165 = vld [vmem:[%s117 + $0xd0] sm:$0xff]
        %v166 = vld [vmem:[%s117 + $0xd8] sm:$0xff]
        %v167 = vld [vmem:[%s117 + $0xe0] sm:$0xff]
        %v168 = vld [vmem:[%s117 + $0xe8] sm:$0xff]
        %v169 = vld [vmem:[%s117 + $0xf0] sm:$0xff]
        %v170 = vld [vmem:[%s117 + $0xf8] sm:$0xff]
        %171 = vmax.xlane.f32.xlu0 %v139
        %v172 = vpop.xlane.xlu0 %171
        %173 = vmax.xlane.f32.xlu0 %v140
        %v174 = vpop.xlane.xlu0 %173
        %175 = vmax.xlane.f32.xlu0 %v141
        %v176 = vpop.xlane.xlu0 %175
        %177 = vmax.xlane.f32.xlu0 %v142
        %v178 = vpop.xlane.xlu0 %177
        %179 = vmax.xlane.f32.xlu0 %v143
        %v180 = vpop.xlane.xlu0 %179
        %181 = vmax.xlane.f32.xlu0 %v144
        %v182 = vpop.xlane.xlu0 %181
        %183 = vmax.xlane.f32.xlu0 %v145
        %v184 = vpop.xlane.xlu0 %183
        %185 = vmax.xlane.f32.xlu0 %v146
        %v186 = vpop.xlane.xlu0 %185
        %187 = vmax.xlane.f32.xlu0 %v147
        %v188 = vpop.xlane.xlu0 %187
        %189 = vmax.xlane.f32.xlu0 %v148
        %v190 = vpop.xlane.xlu0 %189
        %191 = vmax.xlane.f32.xlu0 %v149
        %v192 = vpop.xlane.xlu0 %191
        %193 = vmax.xlane.f32.xlu0 %v150
        %v194 = vpop.xlane.xlu0 %193
        %195 = vmax.xlane.f32.xlu0 %v151
        %v196 = vpop.xlane.xlu0 %195
        %197 = vmax.xlane.f32.xlu0 %v152
        %v198 = vpop.xlane.xlu0 %197
        %199 = vmax.xlane.f32.xlu0 %v153
        %v200 = vpop.xlane.xlu0 %199
        %201 = vmax.xlane.f32.xlu0 %v154
        %v202 = vpop.xlane.xlu0 %201
        %203 = vmax.xlane.f32.xlu0 %v155
        %v204 = vpop.xlane.xlu0 %203
        %205 = vmax.xlane.f32.xlu0 %v156
        %v206 = vpop.xlane.xlu0 %205
        %207 = vmax.xlane.f32.xlu0 %v157
        %v208 = vpop.xlane.xlu0 %207
        %209 = vmax.xlane.f32.xlu0 %v158
        %v210 = vpop.xlane.xlu0 %209
        %211 = vmax.xlane.f32.xlu0 %v159
        %v212 = vpop.xlane.xlu0 %211
        %213 = vmax.xlane.f32.xlu0 %v160
        %v214 = vpop.xlane.xlu0 %213
        %215 = vmax.xlane.f32.xlu0 %v161
        %v216 = vpop.xlane.xlu0 %215
        %217 = vmax.xlane.f32.xlu0 %v162
        %v218 = vpop.xlane.xlu0 %217
        %219 = vmax.xlane.f32.xlu0 %v163
        %v220 = vpop.xlane.xlu0 %219
        %221 = vmax.xlane.f32.xlu0 %v164
        %v222 = vpop.xlane.xlu0 %221
        %223 = vmax.xlane.f32.xlu0 %v165
        %v224 = vpop.xlane.xlu0 %223
        %225 = vmax.xlane.f32.xlu0 %v166
        %v226 = vpop.xlane.xlu0 %225
        %227 = vmax.xlane.f32.xlu0 %v167
        %v228 = vpop.xlane.xlu0 %227
        %229 = vmax.xlane.f32.xlu0 %v168
        %v230 = vpop.xlane.xlu0 %229
        %231 = vmax.xlane.f32.xlu0 %v169
        %v232 = vpop.xlane.xlu0 %231
        %233 = vmax.xlane.f32.xlu0 %v170
        %v234 = vpop.xlane.xlu0 %233
        %v235 = vsub.f32 %v139, %v172
        %v236 = vsub.f32 %v140, %v174
        %v237 = vsub.f32 %v141, %v176
        %v238 = vsub.f32 %v142, %v178
        %v239 = vsub.f32 %v143, %v180
        %v240 = vsub.f32 %v144, %v182
        %v241 = vsub.f32 %v145, %v184
        %v242 = vsub.f32 %v146, %v186
        %v243 = vsub.f32 %v147, %v188
        %v244 = vsub.f32 %v148, %v190
        %v245 = vsub.f32 %v149, %v192
        %v246 = vsub.f32 %v150, %v194
        %v247 = vsub.f32 %v151, %v196
        %v248 = vsub.f32 %v152, %v198
        %v249 = vsub.f32 %v153, %v200
        %v250 = vsub.f32 %v154, %v202
        %v251 = vsub.f32 %v155, %v204
        %v252 = vsub.f32 %v156, %v206
        %v253 = vsub.f32 %v157, %v208
        %v254 = vsub.f32 %v158, %v210
        %v255 = vsub.f32 %v159, %v212
        %v256 = vsub.f32 %v160, %v214
        %v257 = vsub.f32 %v161, %v216
        %v258 = vsub.f32 %v162, %v218
        %v259 = vsub.f32 %v163, %v220
        %v260 = vsub.f32 %v164, %v222
        %v261 = vsub.f32 %v165, %v224
        %v262 = vsub.f32 %v166, %v226
        %v263 = vsub.f32 %v167, %v228
        %v264 = vsub.f32 %v168, %v230
        %v265 = vsub.f32 %v169, %v232
        %v266 = vsub.f32 %v170, %v234
        %v267 = vmul.f32 %v235, 1.442695
        %v268 = vpow.pop %v267
        %v269 = vmul.f32 %v236, 1.442695
        %v270 = vpow.pop %v269
        %v271 = vmul.f32 %v237, 1.442695
        %v272 = vpow.pop %v271
        %v273 = vmul.f32 %v238, 1.442695
        %v274 = vpow.pop %v273
        %v275 = vmul.f32 %v239, 1.442695
        %v276 = vpow.pop %v275
        %v277 = vmul.f32 %v240, 1.442695
        %v278 = vpow.pop %v277
        %v279 = vmul.f32 %v241, 1.442695
        %v280 = vpow.pop %v279
        %v281 = vmul.f32 %v242, 1.442695
        %v282 = vpow.pop %v281
        %v283 = vmul.f32 %v243, 1.442695
        %v284 = vpow.pop %v283
        %v285 = vmul.f32 %v244, 1.442695
        %v286 = vpow.pop %v285
        %v287 = vmul.f32 %v245, 1.442695
        %v288 = vpow.pop %v287
        %v289 = vmul.f32 %v246, 1.442695
        %v290 = vpow.pop %v289
        %v291 = vmul.f32 %v247, 1.442695
        %v292 = vpow.pop %v291
        %v293 = vmul.f32 %v248, 1.442695
        %v294 = vpow.pop %v293
        %v295 = vmul.f32 %v249, 1.442695
        %v296 = vpow.pop %v295
        %v297 = vmul.f32 %v250, 1.442695
        %v298 = vpow.pop %v297
        %v299 = vmul.f32 %v251, 1.442695
        %v300 = vpow.pop %v299
        %v301 = vmul.f32 %v252, 1.442695
        %v302 = vpow.pop %v301
        %v303 = vmul.f32 %v253, 1.442695
        %v304 = vpow.pop %v303
        %v305 = vmul.f32 %v254, 1.442695
        %v306 = vpow.pop %v305
        %v307 = vmul.f32 %v255, 1.442695
        %v308 = vpow.pop %v307
        %v309 = vmul.f32 %v256, 1.442695
        %v310 = vpow.pop %v309
        %v311 = vmul.f32 %v257, 1.442695
        %v312 = vpow.pop %v311
        %v313 = vmul.f32 %v258, 1.442695
        %v314 = vpow.pop %v313
        %v315 = vmul.f32 %v259, 1.442695
        %v316 = vpow.pop %v315
        %v317 = vmul.f32 %v260, 1.442695
        %v318 = vpow.pop %v317
        %v319 = vmul.f32 %v261, 1.442695
        %v320 = vpow.pop %v319
        %v321 = vmul.f32 %v262, 1.442695
        %v322 = vpow.pop %v321
        %v323 = vmul.f32 %v263, 1.442695
        %v324 = vpow.pop %v323
        %v325 = vmul.f32 %v264, 1.442695
        %v326 = vpow.pop %v325
        %v327 = vmul.f32 %v265, 1.442695
        %v328 = vpow.pop %v327
        %v329 = vmul.f32 %v266, 1.442695
        %v330 = vpow.pop %v329
        %331 = vadd.xlane.f32.xlu0 %v268
        %v332 = vpop.xlane.xlu0 %331
        %333 = vadd.xlane.f32.xlu0 %v270
        %v334 = vpop.xlane.xlu0 %333
        %335 = vadd.xlane.f32.xlu0 %v272
        %v336 = vpop.xlane.xlu0 %335
        %337 = vadd.xlane.f32.xlu0 %v274
        %v338 = vpop.xlane.xlu0 %337
        %339 = vadd.xlane.f32.xlu0 %v276
        %v340 = vpop.xlane.xlu0 %339
        %341 = vadd.xlane.f32.xlu0 %v278
        %v342 = vpop.xlane.xlu0 %341
        %343 = vadd.xlane.f32.xlu0 %v280
        %v344 = vpop.xlane.xlu0 %343
        %345 = vadd.xlane.f32.xlu0 %v282
        %v346 = vpop.xlane.xlu0 %345
        %347 = vadd.xlane.f32.xlu0 %v284
        %v348 = vpop.xlane.xlu0 %347
        %349 = vadd.xlane.f32.xlu0 %v286
        %v350 = vpop.xlane.xlu0 %349
        %351 = vadd.xlane.f32.xlu0 %v288
        %v352 = vpop.xlane.xlu0 %351
        %353 = vadd.xlane.f32.xlu0 %v290
        %v354 = vpop.xlane.xlu0 %353
        %355 = vadd.xlane.f32.xlu0 %v292
        %v356 = vpop.xlane.xlu0 %355
        %357 = vadd.xlane.f32.xlu0 %v294
        %v358 = vpop.xlane.xlu0 %357
        %359 = vadd.xlane.f32.xlu0 %v296
        %v360 = vpop.xlane.xlu0 %359
        %361 = vadd.xlane.f32.xlu0 %v298
        %v362 = vpop.xlane.xlu0 %361
        %363 = vadd.xlane.f32.xlu0 %v300
        %v364 = vpop.xlane.xlu0 %363
        %365 = vadd.xlane.f32.xlu0 %v302
        %v366 = vpop.xlane.xlu0 %365
        %367 = vadd.xlane.f32.xlu0 %v304
        %v368 = vpop.xlane.xlu0 %367
        %369 = vadd.xlane.f32.xlu0 %v306
        %v370 = vpop.xlane.xlu0 %369
        %371 = vadd.xlane.f32.xlu0 %v308
        %v372 = vpop.xlane.xlu0 %371
        %373 = vadd.xlane.f32.xlu0 %v310
        %v374 = vpop.xlane.xlu0 %373
        %375 = vadd.xlane.f32.xlu0 %v312
        %v376 = vpop.xlane.xlu0 %375
        %377 = vadd.xlane.f32.xlu0 %v314
        %v378 = vpop.xlane.xlu0 %377
        %379 = vadd.xlane.f32.xlu0 %v316
        %v380 = vpop.xlane.xlu0 %379
        %381 = vadd.xlane.f32.xlu0 %v318
        %v382 = vpop.xlane.xlu0 %381
        %383 = vadd.xlane.f32.xlu0 %v320
        %v384 = vpop.xlane.xlu0 %383
        %385 = vadd.xlane.f32.xlu0 %v322
        %v386 = vpop.xlane.xlu0 %385
        %387 = vadd.xlane.f32.xlu0 %v324
        %v388 = vpop.xlane.xlu0 %387
        %389 = vadd.xlane.f32.xlu0 %v326
        %v390 = vpop.xlane.xlu0 %389
        %391 = vadd.xlane.f32.xlu0 %v328
        %v392 = vpop.xlane.xlu0 %391
        %393 = vadd.xlane.f32.xlu0 %v330
        %v394 = vpop.xlane.xlu0 %393
        %v395 = vrcp.pop %v332
        %v396 = vmul.f32 %v332, %v395
        %v397 = vsub.f32 1.0, %v396
        %v398 = vmul.f32 %v395, %v397
        %v399 = vadd.f32 %v395, %v398
        %vm400 = vweird.f32 %v332
        %vm401 = vweird.f32 %v395
        %vm402 = vmor %vm400, %vm401
        %v403 = vsel %vm402, %v395, %v399
        %v404 = vand.u32 2147483647, %v332
        %vm405 = vcmp.eq.f32.partialorder %v404, 8.507059e+37
        %v406 = vand.u32 %v332, 2147483648
        %v407 = vor.u32 1.1754944e-38, %v406
        %v408 = vsel %vm405, %v407, %v403
        %v409 = vrcp.pop %v334
        %v410 = vmul.f32 %v334, %v409
        %v411 = vsub.f32 1.0, %v410
        %v412 = vmul.f32 %v409, %v411
        %v413 = vadd.f32 %v409, %v412
        %vm414 = vweird.f32 %v334
        %vm415 = vweird.f32 %v409
        %vm416 = vmor %vm414, %vm415
        %v417 = vsel %vm416, %v409, %v413
        %v418 = vand.u32 2147483647, %v334
        %vm419 = vcmp.eq.f32.partialorder %v418, 8.507059e+37
        %v420 = vand.u32 %v334, 2147483648
        %v421 = vor.u32 1.1754944e-38, %v420
        %v422 = vsel %vm419, %v421, %v417
        %v423 = vrcp.pop %v336
        %v424 = vmul.f32 %v336, %v423
        %v425 = vsub.f32 1.0, %v424
        %v426 = vmul.f32 %v423, %v425
        %v427 = vadd.f32 %v423, %v426
        %vm428 = vweird.f32 %v336
        %vm429 = vweird.f32 %v423
        %vm430 = vmor %vm428, %vm429
        %v431 = vsel %vm430, %v423, %v427
        %v432 = vand.u32 2147483647, %v336
        %vm433 = vcmp.eq.f32.partialorder %v432, 8.507059e+37
        %v434 = vand.u32 %v336, 2147483648
        %v435 = vor.u32 1.1754944e-38, %v434
        %v436 = vsel %vm433, %v435, %v431
        %v437 = vrcp.pop %v338
        %v438 = vmul.f32 %v338, %v437
        %v439 = vsub.f32 1.0, %v438
        %v440 = vmul.f32 %v437, %v439
        %v441 = vadd.f32 %v437, %v440
        %vm442 = vweird.f32 %v338
        %vm443 = vweird.f32 %v437
        %vm444 = vmor %vm442, %vm443
        %v445 = vsel %vm444, %v437, %v441
        %v446 = vand.u32 2147483647, %v338
        %vm447 = vcmp.eq.f32.partialorder %v446, 8.507059e+37
        %v448 = vand.u32 %v338, 2147483648
        %v449 = vor.u32 1.1754944e-38, %v448
        %v450 = vsel %vm447, %v449, %v445
        %v451 = vrcp.pop %v340
        %v452 = vmul.f32 %v340, %v451
        %v453 = vsub.f32 1.0, %v452
        %v454 = vmul.f32 %v451, %v453
        %v455 = vadd.f32 %v451, %v454
        %vm456 = vweird.f32 %v340
        %vm457 = vweird.f32 %v451
        %vm458 = vmor %vm456, %vm457
        %v459 = vsel %vm458, %v451, %v455
        %v460 = vand.u32 2147483647, %v340
        %vm461 = vcmp.eq.f32.partialorder %v460, 8.507059e+37
        %v462 = vand.u32 %v340, 2147483648
        %v463 = vor.u32 1.1754944e-38, %v462
        %v464 = vsel %vm461, %v463, %v459
        %v465 = vrcp.pop %v342
        %v466 = vmul.f32 %v342, %v465
        %v467 = vsub.f32 1.0, %v466
        %v468 = vmul.f32 %v465, %v467
        %v469 = vadd.f32 %v465, %v468
        %vm470 = vweird.f32 %v342
        %vm471 = vweird.f32 %v465
        %vm472 = vmor %vm470, %vm471
        %v473 = vsel %vm472, %v465, %v469
        %v474 = vand.u32 2147483647, %v342
        %vm475 = vcmp.eq.f32.partialorder %v474, 8.507059e+37
        %v476 = vand.u32 %v342, 2147483648
        %v477 = vor.u32 1.1754944e-38, %v476
        %v478 = vsel %vm475, %v477, %v473
        %v479 = vrcp.pop %v344
        %v480 = vmul.f32 %v344, %v479
        %v481 = vsub.f32 1.0, %v480
        %v482 = vmul.f32 %v479, %v481
        %v483 = vadd.f32 %v479, %v482
        %vm484 = vweird.f32 %v344
        %vm485 = vweird.f32 %v479
        %vm486 = vmor %vm484, %vm485
        %v487 = vsel %vm486, %v479, %v483
        %v488 = vand.u32 2147483647, %v344
        %vm489 = vcmp.eq.f32.partialorder %v488, 8.507059e+37
        %v490 = vand.u32 %v344, 2147483648
        %v491 = vor.u32 1.1754944e-38, %v490
        %v492 = vsel %vm489, %v491, %v487
        %v493 = vrcp.pop %v346
        %v494 = vmul.f32 %v346, %v493
        %v495 = vsub.f32 1.0, %v494
        %v496 = vmul.f32 %v493, %v495
        %v497 = vadd.f32 %v493, %v496
        %vm498 = vweird.f32 %v346
        %vm499 = vweird.f32 %v493
        %vm500 = vmor %vm498, %vm499
        %v501 = vsel %vm500, %v493, %v497
        %v502 = vand.u32 2147483647, %v346
        %vm503 = vcmp.eq.f32.partialorder %v502, 8.507059e+37
        %v504 = vand.u32 %v346, 2147483648
        %v505 = vor.u32 1.1754944e-38, %v504
        %v506 = vsel %vm503, %v505, %v501
        %v507 = vrcp.pop %v348
        %v508 = vmul.f32 %v348, %v507
        %v509 = vsub.f32 1.0, %v508
        %v510 = vmul.f32 %v507, %v509
        %v511 = vadd.f32 %v507, %v510
        %vm512 = vweird.f32 %v348
        %vm513 = vweird.f32 %v507
        %vm514 = vmor %vm512, %vm513
        %v515 = vsel %vm514, %v507, %v511
        %v516 = vand.u32 2147483647, %v348
        %vm517 = vcmp.eq.f32.partialorder %v516, 8.507059e+37
        %v518 = vand.u32 %v348, 2147483648
        %v519 = vor.u32 1.1754944e-38, %v518
        %v520 = vsel %vm517, %v519, %v515
        %v521 = vrcp.pop %v350
        %v522 = vmul.f32 %v350, %v521
        %v523 = vsub.f32 1.0, %v522
        %v524 = vmul.f32 %v521, %v523
        %v525 = vadd.f32 %v521, %v524
        %vm526 = vweird.f32 %v350
        %vm527 = vweird.f32 %v521
        %vm528 = vmor %vm526, %vm527
        %v529 = vsel %vm528, %v521, %v525
        %v530 = vand.u32 2147483647, %v350
        %vm531 = vcmp.eq.f32.partialorder %v530, 8.507059e+37
        %v532 = vand.u32 %v350, 2147483648
        %v533 = vor.u32 1.1754944e-38, %v532
        %v534 = vsel %vm531, %v533, %v529
        %v535 = vrcp.pop %v352
        %v536 = vmul.f32 %v352, %v535
        %v537 = vsub.f32 1.0, %v536
        %v538 = vmul.f32 %v535, %v537
        %v539 = vadd.f32 %v535, %v538
        %vm540 = vweird.f32 %v352
        %vm541 = vweird.f32 %v535
        %vm542 = vmor %vm540, %vm541
        %v543 = vsel %vm542, %v535, %v539
        %v544 = vand.u32 2147483647, %v352
        %vm545 = vcmp.eq.f32.partialorder %v544, 8.507059e+37
        %v546 = vand.u32 %v352, 2147483648
        %v547 = vor.u32 1.1754944e-38, %v546
        %v548 = vsel %vm545, %v547, %v543
        %v549 = vrcp.pop %v354
        %v550 = vmul.f32 %v354, %v549
        %v551 = vsub.f32 1.0, %v550
        %v552 = vmul.f32 %v549, %v551
        %v553 = vadd.f32 %v549, %v552
        %vm554 = vweird.f32 %v354
        %vm555 = vweird.f32 %v549
        %vm556 = vmor %vm554, %vm555
        %v557 = vsel %vm556, %v549, %v553
        %v558 = vand.u32 2147483647, %v354
        %vm559 = vcmp.eq.f32.partialorder %v558, 8.507059e+37
        %v560 = vand.u32 %v354, 2147483648
        %v561 = vor.u32 1.1754944e-38, %v560
        %v562 = vsel %vm559, %v561, %v557
        %v563 = vrcp.pop %v356
        %v564 = vmul.f32 %v356, %v563
        %v565 = vsub.f32 1.0, %v564
        %v566 = vmul.f32 %v563, %v565
        %v567 = vadd.f32 %v563, %v566
        %vm568 = vweird.f32 %v356
        %vm569 = vweird.f32 %v563
        %vm570 = vmor %vm568, %vm569
        %v571 = vsel %vm570, %v563, %v567
        %v572 = vand.u32 2147483647, %v356
        %vm573 = vcmp.eq.f32.partialorder %v572, 8.507059e+37
        %v574 = vand.u32 %v356, 2147483648
        %v575 = vor.u32 1.1754944e-38, %v574
        %v576 = vsel %vm573, %v575, %v571
        %v577 = vrcp.pop %v358
        %v578 = vmul.f32 %v358, %v577
        %v579 = vsub.f32 1.0, %v578
        %v580 = vmul.f32 %v577, %v579
        %v581 = vadd.f32 %v577, %v580
        %vm582 = vweird.f32 %v358
        %vm583 = vweird.f32 %v577
        %vm584 = vmor %vm582, %vm583
        %v585 = vsel %vm584, %v577, %v581
        %v586 = vand.u32 2147483647, %v358
        %vm587 = vcmp.eq.f32.partialorder %v586, 8.507059e+37
        %v588 = vand.u32 %v358, 2147483648
        %v589 = vor.u32 1.1754944e-38, %v588
        %v590 = vsel %vm587, %v589, %v585
        %v591 = vrcp.pop %v360
        %v592 = vmul.f32 %v360, %v591
        %v593 = vsub.f32 1.0, %v592
        %v594 = vmul.f32 %v591, %v593
        %v595 = vadd.f32 %v591, %v594
        %vm596 = vweird.f32 %v360
        %vm597 = vweird.f32 %v591
        %vm598 = vmor %vm596, %vm597
        %v599 = vsel %vm598, %v591, %v595
        %v600 = vand.u32 2147483647, %v360
        %vm601 = vcmp.eq.f32.partialorder %v600, 8.507059e+37
        %v602 = vand.u32 %v360, 2147483648
        %v603 = vor.u32 1.1754944e-38, %v602
        %v604 = vsel %vm601, %v603, %v599
        %v605 = vrcp.pop %v362
        %v606 = vmul.f32 %v362, %v605
        %v607 = vsub.f32 1.0, %v606
        %v608 = vmul.f32 %v605, %v607
        %v609 = vadd.f32 %v605, %v608
        %vm610 = vweird.f32 %v362
        %vm611 = vweird.f32 %v605
        %vm612 = vmor %vm610, %vm611
        %v613 = vsel %vm612, %v605, %v609
        %v614 = vand.u32 2147483647, %v362
        %vm615 = vcmp.eq.f32.partialorder %v614, 8.507059e+37
        %v616 = vand.u32 %v362, 2147483648
        %v617 = vor.u32 1.1754944e-38, %v616
        %v618 = vsel %vm615, %v617, %v613
        %v619 = vrcp.pop %v364
        %v620 = vmul.f32 %v364, %v619
        %v621 = vsub.f32 1.0, %v620
        %v622 = vmul.f32 %v619, %v621
        %v623 = vadd.f32 %v619, %v622
        %vm624 = vweird.f32 %v364
        %vm625 = vweird.f32 %v619
        %vm626 = vmor %vm624, %vm625
        %v627 = vsel %vm626, %v619, %v623
        %v628 = vand.u32 2147483647, %v364
        %vm629 = vcmp.eq.f32.partialorder %v628, 8.507059e+37
        %v630 = vand.u32 %v364, 2147483648
        %v631 = vor.u32 1.1754944e-38, %v630
        %v632 = vsel %vm629, %v631, %v627
        %v633 = vrcp.pop %v366
        %v634 = vmul.f32 %v366, %v633
        %v635 = vsub.f32 1.0, %v634
        %v636 = vmul.f32 %v633, %v635
        %v637 = vadd.f32 %v633, %v636
        %vm638 = vweird.f32 %v366
        %vm639 = vweird.f32 %v633
        %vm640 = vmor %vm638, %vm639
        %v641 = vsel %vm640, %v633, %v637
        %v642 = vand.u32 2147483647, %v366
        %vm643 = vcmp.eq.f32.partialorder %v642, 8.507059e+37
        %v644 = vand.u32 %v366, 2147483648
        %v645 = vor.u32 1.1754944e-38, %v644
        %v646 = vsel %vm643, %v645, %v641
        %v647 = vrcp.pop %v368
        %v648 = vmul.f32 %v368, %v647
        %v649 = vsub.f32 1.0, %v648
        %v650 = vmul.f32 %v647, %v649
        %v651 = vadd.f32 %v647, %v650
        %vm652 = vweird.f32 %v368
        %vm653 = vweird.f32 %v647
        %vm654 = vmor %vm652, %vm653
        %v655 = vsel %vm654, %v647, %v651
        %v656 = vand.u32 2147483647, %v368
        %vm657 = vcmp.eq.f32.partialorder %v656, 8.507059e+37
        %v658 = vand.u32 %v368, 2147483648
        %v659 = vor.u32 1.1754944e-38, %v658
        %v660 = vsel %vm657, %v659, %v655
        %v661 = vrcp.pop %v370
        %v662 = vmul.f32 %v370, %v661
        %v663 = vsub.f32 1.0, %v662
        %v664 = vmul.f32 %v661, %v663
        %v665 = vadd.f32 %v661, %v664
        %vm666 = vweird.f32 %v370
        %vm667 = vweird.f32 %v661
        %vm668 = vmor %vm666, %vm667
        %v669 = vsel %vm668, %v661, %v665
        %v670 = vand.u32 2147483647, %v370
        %vm671 = vcmp.eq.f32.partialorder %v670, 8.507059e+37
        %v672 = vand.u32 %v370, 2147483648
        %v673 = vor.u32 1.1754944e-38, %v672
        %v674 = vsel %vm671, %v673, %v669
        %v675 = vrcp.pop %v372
        %v676 = vmul.f32 %v372, %v675
        %v677 = vsub.f32 1.0, %v676
        %v678 = vmul.f32 %v675, %v677
        %v679 = vadd.f32 %v675, %v678
        %vm680 = vweird.f32 %v372
        %vm681 = vweird.f32 %v675
        %vm682 = vmor %vm680, %vm681
        %v683 = vsel %vm682, %v675, %v679
        %v684 = vand.u32 2147483647, %v372
        %vm685 = vcmp.eq.f32.partialorder %v684, 8.507059e+37
        %v686 = vand.u32 %v372, 2147483648
        %v687 = vor.u32 1.1754944e-38, %v686
        %v688 = vsel %vm685, %v687, %v683
        %v689 = vrcp.pop %v374
        %v690 = vmul.f32 %v374, %v689
        %v691 = vsub.f32 1.0, %v690
        %v692 = vmul.f32 %v689, %v691
        %v693 = vadd.f32 %v689, %v692
        %vm694 = vweird.f32 %v374
        %vm695 = vweird.f32 %v689
        %vm696 = vmor %vm694, %vm695
        %v697 = vsel %vm696, %v689, %v693
        %v698 = vand.u32 2147483647, %v374
        %vm699 = vcmp.eq.f32.partialorder %v698, 8.507059e+37
        %v700 = vand.u32 %v374, 2147483648
        %v701 = vor.u32 1.1754944e-38, %v700
        %v702 = vsel %vm699, %v701, %v697
        %v703 = vrcp.pop %v376
        %v704 = vmul.f32 %v376, %v703
        %v705 = vsub.f32 1.0, %v704
        %v706 = vmul.f32 %v703, %v705
        %v707 = vadd.f32 %v703, %v706
        %vm708 = vweird.f32 %v376
        %vm709 = vweird.f32 %v703
        %vm710 = vmor %vm708, %vm709
        %v711 = vsel %vm710, %v703, %v707
        %v712 = vand.u32 2147483647, %v376
        %vm713 = vcmp.eq.f32.partialorder %v712, 8.507059e+37
        %v714 = vand.u32 %v376, 2147483648
        %v715 = vor.u32 1.1754944e-38, %v714
        %v716 = vsel %vm713, %v715, %v711
        %v717 = vrcp.pop %v378
        %v718 = vmul.f32 %v378, %v717
        %v719 = vsub.f32 1.0, %v718
        %v720 = vmul.f32 %v717, %v719
        %v721 = vadd.f32 %v717, %v720
        %vm722 = vweird.f32 %v378
        %vm723 = vweird.f32 %v717
        %vm724 = vmor %vm722, %vm723
        %v725 = vsel %vm724, %v717, %v721
        %v726 = vand.u32 2147483647, %v378
        %vm727 = vcmp.eq.f32.partialorder %v726, 8.507059e+37
        %v728 = vand.u32 %v378, 2147483648
        %v729 = vor.u32 1.1754944e-38, %v728
        %v730 = vsel %vm727, %v729, %v725
        %v731 = vrcp.pop %v380
        %v732 = vmul.f32 %v380, %v731
        %v733 = vsub.f32 1.0, %v732
        %v734 = vmul.f32 %v731, %v733
        %v735 = vadd.f32 %v731, %v734
        %vm736 = vweird.f32 %v380
        %vm737 = vweird.f32 %v731
        %vm738 = vmor %vm736, %vm737
        %v739 = vsel %vm738, %v731, %v735
        %v740 = vand.u32 2147483647, %v380
        %vm741 = vcmp.eq.f32.partialorder %v740, 8.507059e+37
        %v742 = vand.u32 %v380, 2147483648
        %v743 = vor.u32 1.1754944e-38, %v742
        %v744 = vsel %vm741, %v743, %v739
        %v745 = vrcp.pop %v382
        %v746 = vmul.f32 %v382, %v745
        %v747 = vsub.f32 1.0, %v746
        %v748 = vmul.f32 %v745, %v747
        %v749 = vadd.f32 %v745, %v748
        %vm750 = vweird.f32 %v382
        %vm751 = vweird.f32 %v745
        %vm752 = vmor %vm750, %vm751
        %v753 = vsel %vm752, %v745, %v749
        %v754 = vand.u32 2147483647, %v382
        %vm755 = vcmp.eq.f32.partialorder %v754, 8.507059e+37
        %v756 = vand.u32 %v382, 2147483648
        %v757 = vor.u32 1.1754944e-38, %v756
        %v758 = vsel %vm755, %v757, %v753
        %v759 = vrcp.pop %v384
        %v760 = vmul.f32 %v384, %v759
        %v761 = vsub.f32 1.0, %v760
        %v762 = vmul.f32 %v759, %v761
        %v763 = vadd.f32 %v759, %v762
        %vm764 = vweird.f32 %v384
        %vm765 = vweird.f32 %v759
        %vm766 = vmor %vm764, %vm765
        %v767 = vsel %vm766, %v759, %v763
        %v768 = vand.u32 2147483647, %v384
        %vm769 = vcmp.eq.f32.partialorder %v768, 8.507059e+37
        %v770 = vand.u32 %v384, 2147483648
        %v771 = vor.u32 1.1754944e-38, %v770
        %v772 = vsel %vm769, %v771, %v767
        %v773 = vrcp.pop %v386
        %v774 = vmul.f32 %v386, %v773
        %v775 = vsub.f32 1.0, %v774
        %v776 = vmul.f32 %v773, %v775
        %v777 = vadd.f32 %v773, %v776
        %vm778 = vweird.f32 %v386
        %vm779 = vweird.f32 %v773
        %vm780 = vmor %vm778, %vm779
        %v781 = vsel %vm780, %v773, %v777
        %v782 = vand.u32 2147483647, %v386
        %vm783 = vcmp.eq.f32.partialorder %v782, 8.507059e+37
        %v784 = vand.u32 %v386, 2147483648
        %v785 = vor.u32 1.1754944e-38, %v784
        %v786 = vsel %vm783, %v785, %v781
        %v787 = vrcp.pop %v388
        %v788 = vmul.f32 %v388, %v787
        %v789 = vsub.f32 1.0, %v788
        %v790 = vmul.f32 %v787, %v789
        %v791 = vadd.f32 %v787, %v790
        %vm792 = vweird.f32 %v388
        %vm793 = vweird.f32 %v787
        %vm794 = vmor %vm792, %vm793
        %v795 = vsel %vm794, %v787, %v791
        %v796 = vand.u32 2147483647, %v388
        %vm797 = vcmp.eq.f32.partialorder %v796, 8.507059e+37
        %v798 = vand.u32 %v388, 2147483648
        %v799 = vor.u32 1.1754944e-38, %v798
        %v800 = vsel %vm797, %v799, %v795
        %v801 = vrcp.pop %v390
        %v802 = vmul.f32 %v390, %v801
        %v803 = vsub.f32 1.0, %v802
        %v804 = vmul.f32 %v801, %v803
        %v805 = vadd.f32 %v801, %v804
        %vm806 = vweird.f32 %v390
        %vm807 = vweird.f32 %v801
        %vm808 = vmor %vm806, %vm807
        %v809 = vsel %vm808, %v801, %v805
        %v810 = vand.u32 2147483647, %v390
        %vm811 = vcmp.eq.f32.partialorder %v810, 8.507059e+37
        %v812 = vand.u32 %v390, 2147483648
        %v813 = vor.u32 1.1754944e-38, %v812
        %v814 = vsel %vm811, %v813, %v809
        %v815 = vrcp.pop %v392
        %v816 = vmul.f32 %v392, %v815
        %v817 = vsub.f32 1.0, %v816
        %v818 = vmul.f32 %v815, %v817
        %v819 = vadd.f32 %v815, %v818
        %vm820 = vweird.f32 %v392
        %vm821 = vweird.f32 %v815
        %vm822 = vmor %vm820, %vm821
        %v823 = vsel %vm822, %v815, %v819
        %v824 = vand.u32 2147483647, %v392
        %vm825 = vcmp.eq.f32.partialorder %v824, 8.507059e+37
        %v826 = vand.u32 %v392, 2147483648
        %v827 = vor.u32 1.1754944e-38, %v826
        %v828 = vsel %vm825, %v827, %v823
        %v829 = vrcp.pop %v394
        %v830 = vmul.f32 %v394, %v829
        %v831 = vsub.f32 1.0, %v830
        %v832 = vmul.f32 %v829, %v831
        %v833 = vadd.f32 %v829, %v832
        %vm834 = vweird.f32 %v394
        %vm835 = vweird.f32 %v829
        %vm836 = vmor %vm834, %vm835
        %v837 = vsel %vm836, %v829, %v833
        %v838 = vand.u32 2147483647, %v394
        %vm839 = vcmp.eq.f32.partialorder %v838, 8.507059e+37
        %v840 = vand.u32 %v394, 2147483648
        %v841 = vor.u32 1.1754944e-38, %v840
        %v842 = vsel %vm839, %v841, %v837
        %v843 = vmul.f32 %v268, %v408
        %v844 = vmul.f32 %v270, %v422
        %v845 = vmul.f32 %v272, %v436
        %v846 = vmul.f32 %v274, %v450
        %v847 = vmul.f32 %v276, %v464
        %v848 = vmul.f32 %v278, %v478
        %v849 = vmul.f32 %v280, %v492
        %v850 = vmul.f32 %v282, %v506
        %v851 = vmul.f32 %v284, %v520
        %v852 = vmul.f32 %v286, %v534
        %v853 = vmul.f32 %v288, %v548
        %v854 = vmul.f32 %v290, %v562
        %v855 = vmul.f32 %v292, %v576
        %v856 = vmul.f32 %v294, %v590
        %v857 = vmul.f32 %v296, %v604
        %v858 = vmul.f32 %v298, %v618
        %v859 = vmul.f32 %v300, %v632
        %v860 = vmul.f32 %v302, %v646
        %v861 = vmul.f32 %v304, %v660
        %v862 = vmul.f32 %v306, %v674
        %v863 = vmul.f32 %v308, %v688
        %v864 = vmul.f32 %v310, %v702
        %v865 = vmul.f32 %v312, %v716
        %v866 = vmul.f32 %v314, %v730
        %v867 = vmul.f32 %v316, %v744
        %v868 = vmul.f32 %v318, %v758
        %v869 = vmul.f32 %v320, %v772
        %v870 = vmul.f32 %v322, %v786
        %v871 = vmul.f32 %v324, %v800
        %v872 = vmul.f32 %v326, %v814
        %v873 = vmul.f32 %v328, %v828
        %v874 = vmul.f32 %v330, %v842
        %875 = vst [vmem:[%s136] sm:$0xff] %v843
        %876 = vst [vmem:[%s136 + $0x8] sm:$0xff] %v844
        %877 = vst [vmem:[%s136 + $0x10] sm:$0xff] %v845
        %878 = vst [vmem:[%s136 + $0x18] sm:$0xff] %v846
        %879 = vst [vmem:[%s136 + $0x20] sm:$0xff] %v847
        %880 = vst [vmem:[%s136 + $0x28] sm:$0xff] %v848
        %881 = vst [vmem:[%s136 + $0x30] sm:$0xff] %v849
        %882 = vst [vmem:[%s136 + $0x38] sm:$0xff] %v850
        %883 = vst [vmem:[%s136 + $0x40] sm:$0xff] %v851
        %884 = vst [vmem:[%s136 + $0x48] sm:$0xff] %v852
        %885 = vst [vmem:[%s136 + $0x50] sm:$0xff] %v853
        %886 = vst [vmem:[%s136 + $0x58] sm:$0xff] %v854
        %887 = vst [vmem:[%s136 + $0x60] sm:$0xff] %v855
        %888 = vst [vmem:[%s136 + $0x68] sm:$0xff] %v856
        %889 = vst [vmem:[%s136 + $0x70] sm:$0xff] %v857
        %890 = vst [vmem:[%s136 + $0x78] sm:$0xff] %v858
        %891 = vst [vmem:[%s136 + $0x80] sm:$0xff] %v859
        %892 = vst [vmem:[%s136 + $0x88] sm:$0xff] %v860
        %893 = vst [vmem:[%s136 + $0x90] sm:$0xff] %v861
        %894 = vst [vmem:[%s136 + $0x98] sm:$0xff] %v862
        %895 = vst [vmem:[%s136 + $0xa0] sm:$0xff] %v863
        %896 = vst [vmem:[%s136 + $0xa8] sm:$0xff] %v864
        %897 = vst [vmem:[%s136 + $0xb0] sm:$0xff] %v865
        %898 = vst [vmem:[%s136 + $0xb8] sm:$0xff] %v866
        %899 = vst [vmem:[%s136 + $0xc0] sm:$0xff] %v867
        %900 = vst [vmem:[%s136 + $0xc8] sm:$0xff] %v868
        %901 = vst [vmem:[%s136 + $0xd0] sm:$0xff] %v869
        %902 = vst [vmem:[%s136 + $0xd8] sm:$0xff] %v870
        %903 = vst [vmem:[%s136 + $0xe0] sm:$0xff] %v871
        %904 = vst [vmem:[%s136 + $0xe8] sm:$0xff] %v872
        %905 = vst [vmem:[%s136 + $0xf0] sm:$0xff] %v873
        %906 = vst [vmem:[%s136 + $0xf8] sm:$0xff] %v874
        %s907 = sand.u32 %s52, 1
        %s908 = scalar_lea.sflag [#allocation4], %s907
        %s909 = sand.u32 %s52, 1
        %s910 = smul.addr %s909, 256
        %s911 = scalar_lea.vmem [#allocation5], %s910
        // Predicated region
        $region29: #{tpu_custom_call.1} parent=23 // pred_check
          %p912 = pneg %p62
        $region30: #{tpu_custom_call.1} parent=23 // pred_check_branch
          %914 = sbr.rel (%p912) target = $region32
        $region31: #{tpu_custom_call.1} parent=23 // pred_region
          %s915 = smul.u32 32, %s18
          %917 = vsyncadd %s908, 0
          %s918 = smul.addr %s915, 8
          %s919 = scalar_lea.hbm %s1, %s918
          %s920 = sshll.u32 %s911, 4
          %s921 = int_to_ptr.vmem [resolvable:$true] %s920
          %s922 = sshll.u32 %s919, 4
          %s923 = int_to_ptr.hbm [resolvable:$true] %s922
          %928 = dma.vmem_to_hbm [thread:$0]  %s921, 4096, %s923, %s908, 128, 128, 8
        $region32: #{tpu_custom_call.1} parent=23 // pred_fallthru
          _
      $region24: #{tpu_custom_call.1} parent=5 // pred_fallthru
        _
      %p929 = scmp.le.s32.totalorder 2, %s13
      // Predicated region
      $region33: #{tpu_custom_call.1} parent=5 // pred_check
        %p930 = pneg %p929
      $region34: #{tpu_custom_call.1} parent=5 // pred_check_branch
        %932 = sbr.rel (%p930) target = $region36
      $region35: #{tpu_custom_call.1} parent=5 // pred_region
        %s933 = ssub.s32 %s13, 2
        // Predicated region
        $region37: #{tpu_custom_call.1} parent=35 // pred_check
          %p934 = pneg %p68
        $region38: #{tpu_custom_call.1} parent=35 // pred_check_branch
          %936 = sbr.rel (%p934) target = $region40
        $region39: #{tpu_custom_call.1} parent=35 // pred_region
          %s937 = sand.u32 %s53, 1
          %s938 = scalar_lea.sflag [#allocation4], %s937
          %s939 = sand.u32 %s53, 1
          %s940 = smul.addr %s939, 256
          %s941 = scalar_lea.vmem [#allocation5], %s940
          %943 = dma.done %s938, 4096
        $region40: #{tpu_custom_call.1} parent=35 // pred_fallthru
          _
      $region36: #{tpu_custom_call.1} parent=5 // pred_fallthru
        _
    $region6: #{tpu_custom_call.1} parent=1 // loop_footer
      %s17 = sadd.s32 1, %s13
    $region7: #{tpu_custom_call.1} parent=1 // loop_footer_branch
      %12 = sbr.rel target = $region3
    $region8: #{tpu_custom_call.1} parent=1 // loop_exit
      _
    %944 = vsyncpa [#allocation3], 1
    %s945 = scalar_lea.sflag [#allocation3], 1
    %946 = vsyncpa %s945, 1
    %947 = vsyncpa [#allocation4], 1
    %s948 = scalar_lea.sflag [#allocation4], 1
    %949 = vsyncpa %s948, 1

</llo_original>
